<compile_context>
chip_gen: v6e
topology: v6e:2x2x1
jax: 0.10.0
libtpu: 0.0.40
codegen_flags: <defaults>
</compile_context>

<pallas_src>
import jax
import jax.numpy as jnp
from jax.experimental import pallas as pl
from jax.experimental.pallas import tpu as pltpu


def _round_up(x, m):
    return ((x + m - 1) // m) * m


def _vmem_budget():
    """(tile_budget_bytes, scoped_vmem_limit_bytes), derived per TPU generation."""
    cap = None
    try:
        info = pltpu.get_tpu_info()
        for attr in ("vmem_capacity_bytes", "vmem_bytes", "vmem_size_bytes"):
            v = getattr(info, attr, None)
            if isinstance(v, int) and v > 0:
                cap = v
                break
    except Exception:
        cap = None
    if cap is None:
        # Conservative fallback: v7x has the smallest per-TensorCore VMEM (64 MiB).
        cap = 64 * 1024 * 1024
    limit = int(cap * 0.75)    # explicit scoped-VMEM limit, leave Mosaic headroom
    budget = int(cap * 0.55)   # what the double-buffered tiles themselves may use
    return budget, limit


def _choose_blocks(m, k, n_pad, budget):
    """Pick (bm, bn, bk): MXU-friendly 256-class tiles, shrink bm first, then
    tile K (reduction axis + accumulator) instead of starving bm/bn."""
    bn = 128
    for cand in (512, 256, 128):
        if n_pad % cand == 0:
            bn = cand
            break
    bm = min(512, _round_up(m, 8))
    bk = k   # full K when it fits (no K padding needed in that case)

    def fits(bm_, bn_, bk_):
        # double-buffered f32 input/bias/output tiles + one f32 accumulator
        tile_bytes = 4 * (2 * (bm_ * bk_ + bk_ * bn_ + bn_ + bm_ * bn_) + bm_ * bn_)
        return tile_bytes <= budget

    while not fits(bm, bn, bk):
        if bm > 256:
            bm = max(256, _round_up(bm // 2, 8))
        elif bk > 512:
            bk = max(512, _round_up(bk // 2, 128))   # K-tiling kicks in here
        elif bn > 256:
            bn //= 2
        elif bm > 8:
            bm = max(8, ((bm // 2) // 8) * 8)
        elif bk > 128:
            bk = max(128, ((bk // 2) // 128) * 128)
        elif bn > 128:
            bn //= 2
        else:
            break
    return bm, bn, bk


def _equirec_kernel(x_ref, w_ref, b_ref, o_ref, acc_ref):
    # x_ref: (bm, bk)   w_ref: (bk, bn)   b_ref: (1, bn)   o_ref/acc_ref: (bm, bn)
    @pl.when(pl.program_id(2) == 0)
    def _init():
        acc_ref[...] = jnp.zeros_like(acc_ref)

    acc_ref[...] += jnp.dot(x_ref[...], w_ref[...],
                            preferred_element_type=jnp.float32)

    @pl.when(pl.program_id(2) == pl.num_programs(2) - 1)
    def _finalize():
        out = acc_ref[...] + b_ref[...].astype(jnp.float32)
        o_ref[...] = jnp.maximum(out, 0.0).astype(o_ref.dtype)


def equirec_forward(x, weight, bias, *, use_pallas=None):
    """relu(x @ weight.T + bias) — matches relu(nn.Linear(input_dim, output_dim)(x)).

    x:      (..., input_dim)
    weight: (output_dim, input_dim)   (PyTorch nn.Linear convention)
    bias:   (output_dim,)
    """
    out_dim, in_dim = weight.shape
    lead_shape = x.shape[:-1]
    m = 1
    for d in lead_shape:
        m *= d

    if use_pallas is None:
        # Per-launch overhead dominates tiny matmuls; let XLA fuse those.
        use_pallas = (m * in_dim * out_dim) >= (1 << 20)
    if not use_pallas:
        return jnp.maximum(x @ weight.T + bias, 0.0)

    budget, vmem_limit = _vmem_budget()

    # Lane-dense output: pad N to >=256 multiple when possible (256-wide MXUs on
    # v6e/v7x); padded cols are zero weights -> relu(bias_pad)=0 rows sliced off.
    n_pad = _round_up(out_dim, 256) if out_dim > 128 else 128

    bm, bn, bk = _choose_blocks(m, in_dim, n_pad, budget)
    k_pad = in_dim if bk == in_dim else _round_up(in_dim, bk)

    x2d = x.reshape(m, in_dim)
    if k_pad != in_dim:
        # TODO(synk): mask the ragged K tail in-kernel instead of this one extra
        # HBM copy of x (only hit when in_dim is too large for a full-K tile).
        x2d = jnp.pad(x2d, ((0, 0), (0, k_pad - in_dim)))

    # One-time wrapper-side transpose + zero-pad of the weight to (K_pad, N_pad).
    w_t = weight.T
    if n_pad != out_dim or k_pad != in_dim:
        w_t = jnp.pad(w_t, ((0, k_pad - in_dim), (0, n_pad - out_dim)))
    b_p = bias if n_pad == out_dim else jnp.pad(bias, ((0, n_pad - out_dim),))
    b2d = b_p.reshape(1, n_pad)

    n_tiles = n_pad // bn
    m_tiles = -(-m // bm)          # ragged last M block, no host-side pad of x
    k_tiles = k_pad // bk
    grid = (n_tiles, m_tiles, k_tiles)

    # Real HBM traffic: W read once when k_tiles == 1 (resident across inner M),
    # x re-streamed once per N tile, output written once.
    w_reads = 1 if k_tiles == 1 else m_tiles
    cost = pl.CostEstimate(
        flops=2 * m * k_pad * n_pad,
        transcendentals=0,
        bytes_accessed=4 * (m * k_pad * n_tiles + k_pad * n_pad * w_reads
                            + n_pad + m * n_pad),
    )

    out2d = pl.pallas_call(
        _equirec_kernel,
        out_shape=jax.ShapeDtypeStruct((m, n_pad), x.dtype),
        grid_spec=pltpu.PrefetchScalarGridSpec(
            num_scalar_prefetch=0,
            grid=grid,
            in_specs=[
                pl.BlockSpec((bm, bk), lambda j, i, k: (i, k)),   # x tile (streamed on inner M/K)
                pl.BlockSpec((bk, bn), lambda j, i, k: (k, j)),   # W tile (resident across inner M)
                pl.BlockSpec((1, bn), lambda j, i, k: (0, j)),    # bias tile
            ],
            out_specs=pl.BlockSpec((bm, bn), lambda j, i, k: (i, j)),
            scratch_shapes=[pltpu.VMEM((bm, bn), jnp.float32)],
        ),
        compiler_params=pltpu.CompilerParams(
            dimension_semantics=("parallel", "parallel", "arbitrary"),
            vmem_limit_bytes=vmem_limit,
        ),
        cost_estimate=cost,
    )(x2d, w_t, b2d)

    out2d = out2d[:, :out_dim]
    return out2d.reshape(*lead_shape, out_dim)


def init_equirec_params(key, input_dim, output_dim, dtype=jnp.float32):
    # Deterministic init mirroring nn.Linear's uniform(-1/sqrt(in), 1/sqrt(in)).
    kw, kb = jax.random.split(key)
    bound = 1.0 / (input_dim ** 0.5)
    weight = jax.random.uniform(
        kw, (output_dim, input_dim), dtype=dtype, minval=-bound, maxval=bound)
    bias = jax.random.uniform(
        kb, (output_dim,), dtype=dtype, minval=-bound, maxval=bound)
    return weight, bias


if __name__ == "__main__":
    key = jax.random.PRNGKey(0)
    k_x, k_p, k_x2 = jax.random.split(key, 3)

    batch, seq, input_dim, output_dim = 2, 8, 32, 64
    x = jax.random.normal(k_x, (batch, seq, input_dim), dtype=jnp.float32)
    weight, bias = init_equirec_params(k_p, input_dim, output_dim)

    # Force the Pallas path even at this small size so the kernel is exercised.
    out = jax.block_until_ready(equirec_forward(x, weight, bias, use_pallas=True))
    ref = jnp.maximum(x @ weight.T + bias, 0.0)
    assert out.shape == (batch, seq, output_dim)
    assert jnp.allclose(out, ref, atol=1e-4, rtol=1e-4)

    # Larger, non-block-aligned M exercises the ragged (cdiv) M tiling path.
    x_big = jax.random.normal(k_x2, (3, 700, input_dim), dtype=jnp.float32)
    out_big = jax.block_until_ready(
        equirec_forward(x_big, weight, bias, use_pallas=True))
    ref_big = jnp.maximum(x_big @ weight.T + bias, 0.0)
    assert out_big.shape == (3, 700, output_dim)
    assert jnp.allclose(out_big, ref_big, atol=1e-4, rtol=1e-4)

    print("KERNEL_OK")
</pallas_src>

<mosaic_0001>
module attributes {stable_mosaic.version = 11 : i64} {
  func.func @_equirec_kernel(%arg0: i32, %arg1: i32, %arg2: i32, %arg3: memref<16x32xf32, #tpu.memory_space<vmem>>, %arg4: memref<32x128xf32, #tpu.memory_space<vmem>>, %arg5: memref<1x128xf32, #tpu.memory_space<vmem>>, %arg6: memref<16x128xf32, #tpu.memory_space<vmem>>, %arg7: memref<16x128xf32, #tpu.memory_space<vmem>>) attributes {dimension_semantics = [#tpu.dimension_semantics<parallel>, #tpu.dimension_semantics<parallel>, #tpu.dimension_semantics<arbitrary>], iteration_bounds = array<i64: 1, 1, 1>, scalar_prefetch = 0 : i64, scratch_operands = 1 : i64, tpu.core_type = #tpu.core_type<tc>, window_params = [{transform_indices = @transform_0, window_bounds = array<i64: 16, 32>}, {transform_indices = @transform_1, window_bounds = array<i64: 32, 128>}, {transform_indices = @transform_2, window_bounds = array<i64: 1, 128>}, {transform_indices = @transform_3, window_bounds = array<i64: 16, 128>}]} {
    %c0_i32 = arith.constant 0 : i32
    %0 = arith.cmpi eq, %arg2, %c0_i32 : i32
    %1 = arith.extui %0 : i1 to i32
    %c0_i32_0 = arith.constant 0 : i32
    %2 = arith.cmpi ne, %1, %c0_i32_0 : i32
    scf.if %2 {
      %cst_10 = arith.constant 0.000000e+00 : f32
      %12 = vector.broadcast %cst_10 : f32 to vector<16x128xf32>
      %c0_11 = arith.constant 0 : index
      %c0_12 = arith.constant 0 : index
      %13 = vector.load %arg7[%c0_11, %c0_12] : memref<16x128xf32, #tpu.memory_space<vmem>>, vector<16x128xf32>
      tpu.vector_store %arg7[%c0_11, %c0_12], %12 {strides = array<i32>} : memref<16x128xf32, #tpu.memory_space<vmem>>, vector<16x128xf32>,
    } else {
    }
    %c0 = arith.constant 0 : index
    %c0_1 = arith.constant 0 : index
    %3 = vector.load %arg7[%c0, %c0_1] : memref<16x128xf32, #tpu.memory_space<vmem>>, vector<16x128xf32>
    %c0_2 = arith.constant 0 : index
    %c0_3 = arith.constant 0 : index
    %4 = vector.load %arg3[%c0_2, %c0_3] : memref<16x32xf32, #tpu.memory_space<vmem>>, vector<16x32xf32>
    %c0_4 = arith.constant 0 : index
    %c0_5 = arith.constant 0 : index
    %5 = vector.load %arg4[%c0_4, %c0_5] : memref<32x128xf32, #tpu.memory_space<vmem>>, vector<32x128xf32>
    %cst = arith.constant dense<0.000000e+00> : vector<16x128xf32>
    %6 = tpu.matmul %4, %5, %cst {dimension_numbers = #tpu.dot_dimension_numbers<[1], [0], [0], [1], [0, 0, 1, 1], [], []>} : vector<16x32xf32>, vector<32x128xf32>, vector<16x128xf32> -> vector<16x128xf32>
    %7 = arith.addf %3, %6 : vector<16x128xf32>
    %c0_6 = arith.constant 0 : index
    %c0_7 = arith.constant 0 : index
    %8 = vector.load %arg7[%c0_6, %c0_7] : memref<16x128xf32, #tpu.memory_space<vmem>>, vector<16x128xf32>
    tpu.vector_store %arg7[%c0_6, %c0_7], %7 {strides = array<i32>} : memref<16x128xf32, #tpu.memory_space<vmem>>, vector<16x128xf32>,
    %c0_i32_8 = arith.constant 0 : i32
    %9 = arith.cmpi eq, %arg2, %c0_i32_8 : i32
    %10 = arith.extui %9 : i1 to i32
    %c0_i32_9 = arith.constant 0 : i32
    %11 = arith.cmpi ne, %10, %c0_i32_9 : i32
    scf.if %11 {
      %c0_10 = arith.constant 0 : index
      %c0_11 = arith.constant 0 : index
      %12 = vector.load %arg7[%c0_10, %c0_11] : memref<16x128xf32, #tpu.memory_space<vmem>>, vector<16x128xf32>
      %c0_12 = arith.constant 0 : index
      %c0_13 = arith.constant 0 : index
      %13 = vector.load %arg5[%c0_12, %c0_13] : memref<1x128xf32, #tpu.memory_space<vmem>>, vector<1x128xf32>
      %14 = vector.broadcast %13 : vector<1x128xf32> to vector<16x128xf32>
      %15 = arith.addf %12, %14 : vector<16x128xf32>
      %cst_14 = arith.constant 0.000000e+00 : f32
      %16 = vector.broadcast %cst_14 : f32 to vector<16x128xf32>
      %17 = arith.maximumf %15, %16 : vector<16x128xf32>
      %c0_15 = arith.constant 0 : index
      %c0_16 = arith.constant 0 : index
      %18 = vector.load %arg6[%c0_15, %c0_16] : memref<16x128xf32, #tpu.memory_space<vmem>>, vector<16x128xf32>
      tpu.vector_store %arg6[%c0_15, %c0_16], %17 {strides = array<i32>} : memref<16x128xf32, #tpu.memory_space<vmem>>, vector<16x128xf32>,
    } else {
    }
    return
  }
  func.func @transform_0(%arg0: i32, %arg1: i32, %arg2: i32) -> (i32, i32) {
    %c0_i32 = arith.constant 0 : i32
    return %arg1, %arg2 : i32, i32
  }
  func.func @transform_1(%arg0: i32, %arg1: i32, %arg2: i32) -> (i32, i32) {
    %c0_i32 = arith.constant 0 : i32
    return %arg2, %arg0 : i32, i32
  }
  func.func @transform_2(%arg0: i32, %arg1: i32, %arg2: i32) -> (i32, i32) {
    %c0_i32 = arith.constant 0 : i32
    %c0_i32_0 = arith.constant 0 : i32
    return %c0_i32, %arg0 : i32, i32
  }
  func.func @transform_3(%arg0: i32, %arg1: i32, %arg2: i32) -> (i32, i32) {
    %c0_i32 = arith.constant 0 : i32
    return %arg1, %arg0 : i32, i32
  }
}

</mosaic_0001>

<llo_original>
// kernel: tpu_custom_call.1
$region0: #{tpu_custom_call.1}
  #allocation0 [shape = 'u32[]', space=smem, size = 0x4, offset = 0x4, fixed_abs, tag = 'smem constant byte address 0x4 - core index']
  #allocation1 [shape = 'u32[144,128]{1,0:T(1,128)}', space=vmem, size = 0x12000, scoped, tag = 'internal scratch']
  #allocation2 [shape = 'f32[16,128]{1,0:T(8,128)}', space=vmem, size = 0x2000, scoped, tag = 'scratch operand']
  %s0 = inlined_call_operand.hbm [shape: f32[16,32], index: 0, kind: input, shape index: {}]
  %s1 = inlined_call_operand.hbm [shape: f32[32,128], index: 1, kind: input, shape index: {}]
  %s2 = inlined_call_operand.vmem [shape: f32[1,128], index: 2, kind: input, shape index: {}]
  %s3 = inlined_call_operand.hbm [shape: f32[16,128], index: 3, kind: output, shape index: {}]
  %s4 = sld [smem:[#allocation0]]
  $region38: #{tpu_custom_call.1} parent=0
    _
  %s6 = ssub.s32 1, %s4
  %s7 = scalar_select 0, %s6, %s4
  $region1: #{tpu_custom_call.1} parent=0
    #allocation3 [shape = 'u8[8192]{0}', space=vmem, size = 0x2000, scoped, tag = 'input window, operand 0, single buffered']
    #allocation4 [shape = 's32[1]{0}', space=sflag, size = 0x4, scoped, tag = 'scoped memory for tpu_custom_call.1']
    #allocation5 [shape = 's32[1]{0}', space=sflag, size = 0x4, scoped, tag = 'scoped memory for tpu_custom_call.1']
    #allocation6 [shape = 'u8[16384]{0}', space=vmem, size = 0x4000, scoped, tag = 'input window, operand 1, single buffered']
    #allocation7 [shape = 's32[1]{0}', space=sflag, size = 0x4, scoped, tag = 'scoped memory for tpu_custom_call.1']
    #allocation8 [shape = 'u8[8192]{0}', space=vmem, size = 0x2000, scoped, tag = 'output window, operand 0, single buffered']
    %8 = vsyncpa [#allocation4], 0
    %9 = vsyncpa [#allocation7], 0
    %10 = vsyncpa [#allocation5], 0
    // Predicated region
    $region2: #{tpu_custom_call.1} parent=1 // pred_check
      _
    $region3: #{tpu_custom_call.1} parent=1 // pred_check_branch
      %12 = sbr.rel (0) target = $region5
    $region4: #{tpu_custom_call.1} parent=1 // pred_region
      %s14 = ssub.s32 256, 256
      %15 = vsyncadd [#allocation4], %s14
      %s16 = sshll.u32 [#allocation3], 4
      %s17 = int_to_ptr.vmem [resolvable:$true] %s16
      %22 = dma.hbm_to_vmem [thread:$0]  %s0, 256, %s17, [#allocation4], 128, 128, 8
    $region5: #{tpu_custom_call.1} parent=1 // pred_fallthru
      _
    // Predicated region
    $region6: #{tpu_custom_call.1} parent=1 // pred_check
      _
    $region7: #{tpu_custom_call.1} parent=1 // pred_check_branch
      %24 = sbr.rel (0) target = $region9
    $region8: #{tpu_custom_call.1} parent=1 // pred_region
      %s26 = ssub.s32 512, 512
      %27 = vsyncadd [#allocation7], %s26
      %s28 = sshll.u32 [#allocation6], 4
      %s29 = int_to_ptr.vmem [resolvable:$true] %s28
      %34 = dma.hbm_to_vmem [thread:$0]  %s1, 512, %s29, [#allocation7], 128, 128, 8
    $region9: #{tpu_custom_call.1} parent=1 // pred_fallthru
      _
    // Predicated region
    $region10: #{tpu_custom_call.1} parent=1 // pred_check
      _
    $region11: #{tpu_custom_call.1} parent=1 // pred_check_branch
      %36 = sbr.rel (0) target = $region13
    $region12: #{tpu_custom_call.1} parent=1 // pred_region
      _
    $region13: #{tpu_custom_call.1} parent=1 // pred_fallthru
      _
    // Predicated region
    $region14: #{tpu_custom_call.1} parent=1 // pred_check
      _
    $region15: #{tpu_custom_call.1} parent=1 // pred_check_branch
      %38 = sbr.rel (0) target = $region17
    $region16: #{tpu_custom_call.1} parent=1 // pred_region
      %39 = dma.done [#allocation4], 256
    $region17: #{tpu_custom_call.1} parent=1 // pred_fallthru
      _
    // Predicated region
    $region18: #{tpu_custom_call.1} parent=1 // pred_check
      _
    $region19: #{tpu_custom_call.1} parent=1 // pred_check_branch
      %41 = sbr.rel (0) target = $region21
    $region20: #{tpu_custom_call.1} parent=1 // pred_region
      %42 = dma.done [#allocation7], 512
    $region21: #{tpu_custom_call.1} parent=1 // pred_fallthru
      _
    %p43 = scmp.eq.s32.totalorder 0, 0
    // Predicated region
    $region22: #{tpu_custom_call.1} parent=1 // pred_check
      %p44 = pneg %p43
    $region23: #{tpu_custom_call.1} parent=1 // pred_check_branch
      %46 = sbr.rel (%p44) target = $region25
    $region24: #{tpu_custom_call.1} parent=1 // pred_region
      %47 = vst [vmem:[#allocation2] sm:$0xff] 0.0
      %48 = vst [vmem:[#allocation2 + $0x8] sm:$0xff] 0.0
    $region25: #{tpu_custom_call.1} parent=1 // pred_fallthru
      _
    %v49 = vld [vmem:[#allocation2] sm:$0xff]
    %v50 = vld [vmem:[#allocation2 + $0x8] sm:$0xff]
    %v51 = vld [vmem:[#allocation3] sm:$0xff]
    %v52 = vld [vmem:[#allocation3 + $0x8] sm:$0xff]
    %v53 = vld [vmem:[#allocation6] sm:$0xff]
    %v54 = vld [vmem:[#allocation6 + $0x8] sm:$0xff]
    %v55 = vld [vmem:[#allocation6 + $0x10] sm:$0xff]
    %v56 = vld [vmem:[#allocation6 + $0x18] sm:$0xff]
    %vm57 = vcmask 261120
    %v59 = vsel %vm57, %v51, 0
    %v62 = vsel %vm57, %v52, 0
    %64 = vmatprep.subr.mxu0 0.0
    %65 = vmatpush1.msra.mxu0 0.0
    %66 = vmatprep.subr.mxu0 0.0
    %67 = vmatpush1.msra.mxu0 0.0
    %68 = vmatprep.subr.mxu0 0.0
    %69 = vmatpush1.msra.mxu0 0.0
    %70 = vmatprep.subr.mxu0 0.0
    %71 = vmatpush1.msra.mxu0 0.0
    %72 = vmatprep.subr.mxu0 0.0
    %73 = vmatpush1.msra.mxu0 0.0
    %74 = vmatprep.subr.mxu0 0.0
    %75 = vmatpush1.msra.mxu0 0.0
    %76 = vmatprep.subr.mxu0 0.0
    %77 = vmatpush1.msra.mxu0 0.0
    %78 = vmatprep.subr.mxu0 0.0
    %79 = vmatpush1.msra.mxu0 0.0
    %80 = vmatprep.subr.mxu0 0.0
    %81 = vmatpush1.msra.mxu0 0.0
    %82 = vmatprep.subr.mxu0 0.0
    %83 = vmatpush1.msra.mxu0 0.0
    %84 = vmatprep.subr.mxu0 0.0
    %85 = vmatpush1.msra.mxu0 0.0
    %86 = vmatprep.subr.mxu0 0.0
    %87 = vmatpush1.msra.mxu0 0.0
    %88 = vmatprep.subr.mxu0 0.0
    %89 = vmatpush1.msra.mxu0 %v56
    %90 = vmatprep.subr.mxu0 0.0
    %91 = vmatpush1.msra.mxu0 %v55
    %92 = vmatprep.subr.mxu0 0.0
    %93 = vmatpush1.msra.mxu0 %v54
    %94 = vmatprep.subr.mxu0 0.0
    %95 = vmatpush1.msra.mxu0 %v53
    %96 = vmatprep.subr.mxu0 0.0
    %97 = vmatpush2.msra.mxu0 0.0
    %98 = vmatprep.subr.mxu0 0.0
    %99 = vmatpush2.msra.mxu0 0.0
    %100 = vmatprep.subr.mxu0 0.0
    %101 = vmatpush2.msra.mxu0 0.0
    %102 = vmatprep.subr.mxu0 0.0
    %103 = vmatpush2.msra.mxu0 0.0
    %104 = vmatprep.subr.mxu0 0.0
    %105 = vmatpush2.msra.mxu0 0.0
    %106 = vmatprep.subr.mxu0 0.0
    %107 = vmatpush2.msra.mxu0 0.0
    %108 = vmatprep.subr.mxu0 0.0
    %109 = vmatpush2.msra.mxu0 0.0
    %110 = vmatprep.subr.mxu0 0.0
    %111 = vmatpush2.msra.mxu0 0.0
    %112 = vmatprep.subr.mxu0 0.0
    %113 = vmatpush2.msra.mxu0 0.0
    %114 = vmatprep.subr.mxu0 0.0
    %115 = vmatpush2.msra.mxu0 0.0
    %116 = vmatprep.subr.mxu0 0.0
    %117 = vmatpush2.msra.mxu0 0.0
    %118 = vmatprep.subr.mxu0 0.0
    %119 = vmatpush2.msra.mxu0 0.0
    %120 = vmatprep.subr.mxu0 0.0
    %121 = vmatpush2.msra.mxu0 0.0
    %122 = vmatprep.subr.mxu0 0.0
    %123 = vmatpush2.msra.mxu0 0.0
    %124 = vmatprep.subr.mxu0 0.0
    %125 = vmatpush2.msra.mxu0 0.0
    %126 = vmatprep.subr.mxu0 0.0
    %127 = vmatpush2.msra.mxu0 0.0
    %128 = vmatprep.mubr.f32.mxu0 0.0
    %129 = vmatmul.mubr.f32.gmra.mxu0 %v59
    %v130 = vpop.f32.mrf.mxu0
    %v131 = vadd.f32 0.0, %v130
    %v132 = vpop.f32.mrf.mxu0
    %133 = vmatprep.mubr.f32.mxu0 0.0
    %134 = vmatmul.mubr.f32.gmra.mxu0 %v62
    %v135 = vpop.f32.mrf.mxu0
    %v136 = vadd.f32 0.0, %v135
    %v137 = vpop.f32.mrf.mxu0
    %138 = vdwg.mxu0
    %v139 = vadd.f32 %v49, %v131
    %v140 = vadd.f32 %v50, %v136
    %141 = vst [vmem:[#allocation2] sm:$0xff] %v139
    %142 = vst [vmem:[#allocation2 + $0x8] sm:$0xff] %v140
    // Predicated region
    $region26: #{tpu_custom_call.1} parent=1 // pred_check
      %p143 = pneg %p43
    $region27: #{tpu_custom_call.1} parent=1 // pred_check_branch
      %145 = sbr.rel (%p143) target = $region29
    $region28: #{tpu_custom_call.1} parent=1 // pred_region
      %v146 = vld [vmem:[#allocation2] sm:$0xff]
      %v147 = vld [vmem:[#allocation2 + $0x8] sm:$0xff]
      %v148 = vld [vmem:[%s2] sm:$0x1]
      %v150 = vlaneseq
      %v151 = vshrl.u32 %v150, 7
      %v152 = vsub.s32 0, %v151
      %v153 = vrot.slane %v148, %v152
      %v155 = vadd.f32 %v146, %v153
      %v156 = vadd.f32 %v147, %v153
      %v157 = vmax.f32 %v155, 0.0
      %v158 = vmax.f32 %v156, 0.0
      %159 = vst [vmem:[#allocation8] sm:$0xff] %v157
      %160 = vst [vmem:[#allocation8 + $0x8] sm:$0xff] %v158
    $region29: #{tpu_custom_call.1} parent=1 // pred_fallthru
      _
    // Predicated region
    $region30: #{tpu_custom_call.1} parent=1 // pred_check
      _
    $region31: #{tpu_custom_call.1} parent=1 // pred_check_branch
      %162 = sbr.rel (0) target = $region33
    $region32: #{tpu_custom_call.1} parent=1 // pred_region
      %s164 = ssub.s32 256, 256
      %165 = vsyncadd [#allocation5], %s164
      %s166 = sshll.u32 [#allocation8], 4
      %s167 = int_to_ptr.vmem [resolvable:$true] %s166
      %172 = dma.vmem_to_hbm [thread:$0]  %s167, 256, %s3, [#allocation5], 128, 128, 8
    $region33: #{tpu_custom_call.1} parent=1 // pred_fallthru
      _
    // Predicated region
    $region34: #{tpu_custom_call.1} parent=1 // pred_check
      _
    $region35: #{tpu_custom_call.1} parent=1 // pred_check_branch
      %174 = sbr.rel (0) target = $region37
    $region36: #{tpu_custom_call.1} parent=1 // pred_region
      %175 = dma.done [#allocation5], 256
    $region37: #{tpu_custom_call.1} parent=1 // pred_fallthru
      _
    %176 = vsyncpa [#allocation4], 1
    %177 = vsyncpa [#allocation7], 1
    %178 = vsyncpa [#allocation5], 1

</llo_original>
